<compile_context>
chip_gen: v7x
topology: tpu7x:2x2x1
jax: 0.10.0
libtpu: 0.0.40
codegen_flags: <defaults>
</compile_context>

<pallas_src>
import math

import jax
import jax.numpy as jnp
from jax.experimental import pallas as pl
from jax.experimental.pallas import tpu as pltpu


def _round_up(n: int, m: int) -> int:
    return (n + m - 1) // m * m


def _choose_rows(batch: int, block_rows: int):
    """Pick (row_tile, num_steps) for the batch grid.

    - row tile is a multiple of 8 sublanes, capped at block_rows;
    - if more than one grid step is needed, the step count is made EVEN so
      the 'parallel' grid axis splits evenly across v7x's two TensorCores.
    """
    bm_cap = max(8, _round_up(block_rows, 8))
    if batch <= bm_cap:
        return _round_up(max(batch, 1), 8), 1
    steps = math.ceil(batch / bm_cap)
    if steps % 2:
        steps += 1
    bm = _round_up(math.ceil(batch / steps), 8)
    steps = math.ceil(batch / bm)
    if steps > 1 and steps % 2:
        steps += 1
    return bm, steps


def mlp_kernel(x_ref,
               w1_ref, b1_ref,
               w2_ref, b2_ref,
               w3_ref, b3_ref,
               w4_ref, b4_ref,
               o_ref):
    x = x_ref[...]

    # fc1 + relu : [bm,192] @ [192,96] -> [bm,96]
    h = jnp.dot(x, w1_ref[...], preferred_element_type=jnp.float32) + b1_ref[...]
    h = jnp.maximum(h, 0.0)

    # fc2 + relu : [bm,96] @ [96,48] -> [bm,48]
    h = jnp.dot(h, w2_ref[...], preferred_element_type=jnp.float32) + b2_ref[...]
    h = jnp.maximum(h, 0.0)

    # fc3 + relu : [bm,48] @ [48,24] -> [bm,24]
    h = jnp.dot(h, w3_ref[...], preferred_element_type=jnp.float32) + b3_ref[...]
    h = jnp.maximum(h, 0.0)

    # fc4 + relu : [bm,24] @ [24,2] -> [bm,2]   (single padded MXU pass)
    logits = jnp.dot(h, w4_ref[...], preferred_element_type=jnp.float32) + b4_ref[...]
    logits = jnp.maximum(logits, 0.0)

    # 2-class softmax, elementwise (no XLU lane reduction):
    #   p0 = exp(l0) / (exp(l0) + exp(l1)) = 1 / (1 + exp(l1 - l0))
    # Exact reciprocal keeps the 1e-5 tolerance; both probability lanes are
    # written with ONE full-block store (no per-column masked vst).
    l0 = logits[:, 0:1]
    l1 = logits[:, 1:2]
    p0 = pl.reciprocal(1.0 + jnp.exp(l1 - l0), approx=False)
    o_ref[...] = jnp.concatenate([p0, 1.0 - p0], axis=1)


def net_forward(x, params, *, block_rows=2048):
    """x: [B, 192] float32.  params: dict of (in,out) weights and (1,out) biases."""
    B, F = x.shape
    assert F == 192

    bm, steps = _choose_rows(B, block_rows)
    Bp = bm * steps
    if Bp != B:
        x = jnp.pad(x, ((0, Bp - B), (0, 0)))

    grid = (steps,)

    x_spec = pl.BlockSpec((bm, F), lambda i: (i, 0))
    o_spec = pl.BlockSpec((bm, 2), lambda i: (i, 0))

    # Weights / biases: full-array blocks pinned to block (0,0) -> DMA'd once,
    # kept resident in VMEM across all batch-grid steps.
    param_order = ("w1", "b1", "w2", "b2", "w3", "b3", "w4", "b4")
    param_specs = [
        pl.BlockSpec(tuple(params[name].shape), lambda i: (0, 0))
        for name in param_order
    ]

    cp_kwargs = dict(dimension_semantics=("parallel",))
    if bm > 4096:
        # Only relevant if a caller asks for very large row tiles: v5e's scoped
        # VMEM default is 16 MiB, so give the double-buffered x stream headroom.
        cp_kwargs["vmem_limit_bytes"] = 64 << 20

    out = pl.pallas_call(
        mlp_kernel,
        out_shape=jax.ShapeDtypeStruct((Bp, 2), jnp.float32),
        grid=grid,
        in_specs=[x_spec] + param_specs,
        out_specs=o_spec,
        compiler_params=pltpu.CompilerParams(**cp_kwargs),
    )(x, *(params[name] for name in param_order))

    return out[:B]


def init_params(key):
    """Deterministic init mimicking PyTorch nn.Linear (uniform +-1/sqrt(fan_in)).
    Weights are stored already transposed to (in, out); biases as (1, out)."""
    dims = [(192, 96), (96, 48), (48, 24), (24, 2)]
    params = {}
    for i, (fan_in, fan_out) in enumerate(dims, start=1):
        key, kw, kb = jax.random.split(key, 3)
        bound = 1.0 / jnp.sqrt(float(fan_in))
        params[f"w{i}"] = jax.random.uniform(
            kw, (fan_in, fan_out), jnp.float32, minval=-bound, maxval=bound)
        params[f"b{i}"] = jax.random.uniform(
            kb, (1, fan_out), jnp.float32, minval=-bound, maxval=bound)
    return params


def reference_forward(x, params):
    """Pure-JAX reference of the PyTorch forward pass (relu on fc4 logits, then
    softmax over dim=1 — exactly what the original `Net.forward` does)."""
    h = x
    for i in range(1, 5):
        h = jnp.maximum(h @ params[f"w{i}"] + params[f"b{i}"], 0.0)
    return jax.nn.softmax(h, axis=-1)


if __name__ == "__main__":
    key = jax.random.PRNGKey(0)
    key, kx1, kx2 = jax.random.split(key, 3)
    params = init_params(key)

    # 1) Spec-sized batch (matches `batch = 30` in the PyTorch script): grid=1.
    batch = 30
    x_small = jax.random.normal(kx1, (batch, 192), jnp.float32)
    out_small = jax.block_until_ready(net_forward(x_small, params))
    ref_small = reference_forward(x_small, params)
    assert out_small.shape == (batch, 2)
    assert jnp.allclose(out_small, ref_small, atol=1e-5, rtol=1e-5)
    assert jnp.allclose(jnp.sum(out_small, axis=-1), 1.0, atol=1e-5)

    # 2) Larger batch to exercise the multi-step batch grid: with the default
    #    block_rows=2048 this chooses an EVEN grid (2 steps of 1504 rows),
    #    balanced across v7x's two TensorCores, padded rows sliced off.
    big = 3000
    x_big = jax.random.normal(kx2, (big, 192), jnp.float32)
    out_big = jax.block_until_ready(net_forward(x_big, params))
    ref_big = reference_forward(x_big, params)
    assert out_big.shape == (big, 2)
    assert jnp.allclose(out_big, ref_big, atol=1e-5, rtol=1e-5)
    assert jnp.allclose(jnp.sum(out_big, axis=-1), 1.0, atol=1e-5)

    print("KERNEL_OK")
</pallas_src>

<mosaic_0001>
module attributes {stable_mosaic.version = 11 : i64} {
  func.func @mlp_kernel(%arg0: i32, %arg1: memref<32x192xf32, #tpu.memory_space<vmem>>, %arg2: memref<192x96xf32, #tpu.memory_space<vmem>>, %arg3: memref<1x96xf32, #tpu.memory_space<vmem>>, %arg4: memref<96x48xf32, #tpu.memory_space<vmem>>, %arg5: memref<1x48xf32, #tpu.memory_space<vmem>>, %arg6: memref<48x24xf32, #tpu.memory_space<vmem>>, %arg7: memref<1x24xf32, #tpu.memory_space<vmem>>, %arg8: memref<24x2xf32, #tpu.memory_space<vmem>>, %arg9: memref<1x2xf32, #tpu.memory_space<vmem>>, %arg10: memref<32x2xf32, #tpu.memory_space<vmem>>) attributes {dimension_semantics = [#tpu.dimension_semantics<parallel>], iteration_bounds = array<i64: 1>, scalar_prefetch = 0 : i64, scratch_operands = 0 : i64, tpu.core_type = #tpu.core_type<tc>, window_params = [{transform_indices = @transform_0, window_bounds = array<i64: 32, 192>}, {pipeline_mode = #tpu.pipeline_mode<synchronous>, transform_indices = @transform_1, window_bounds = array<i64: 192, 96>}, {pipeline_mode = #tpu.pipeline_mode<synchronous>, transform_indices = @transform_2, window_bounds = array<i64: 1, 96>}, {pipeline_mode = #tpu.pipeline_mode<synchronous>, transform_indices = @transform_3, window_bounds = array<i64: 96, 48>}, {pipeline_mode = #tpu.pipeline_mode<synchronous>, transform_indices = @transform_4, window_bounds = array<i64: 1, 48>}, {pipeline_mode = #tpu.pipeline_mode<synchronous>, transform_indices = @transform_5, window_bounds = array<i64: 48, 24>}, {pipeline_mode = #tpu.pipeline_mode<synchronous>, transform_indices = @transform_6, window_bounds = array<i64: 1, 24>}, {pipeline_mode = #tpu.pipeline_mode<synchronous>, transform_indices = @transform_7, window_bounds = array<i64: 24, 2>}, {pipeline_mode = #tpu.pipeline_mode<synchronous>, transform_indices = @transform_8, window_bounds = array<i64: 1, 2>}, {transform_indices = @transform_9, window_bounds = array<i64: 32, 2>}]} {
    %c0 = arith.constant 0 : index
    %c0_0 = arith.constant 0 : index
    %0 = vector.load %arg1[%c0, %c0_0] : memref<32x192xf32, #tpu.memory_space<vmem>>, vector<32x192xf32>
    %c0_1 = arith.constant 0 : index
    %c0_2 = arith.constant 0 : index
    %1 = vector.load %arg2[%c0_1, %c0_2] : memref<192x96xf32, #tpu.memory_space<vmem>>, vector<192x96xf32>
    %cst = arith.constant dense<0.000000e+00> : vector<32x96xf32>
    %2 = tpu.matmul %0, %1, %cst {dimension_numbers = #tpu.dot_dimension_numbers<[1], [0], [0], [1], [0, 0, 1, 1], [], []>} : vector<32x192xf32>, vector<192x96xf32>, vector<32x96xf32> -> vector<32x96xf32>
    %c0_3 = arith.constant 0 : index
    %c0_4 = arith.constant 0 : index
    %3 = vector.load %arg3[%c0_3, %c0_4] : memref<1x96xf32, #tpu.memory_space<vmem>>, vector<1x96xf32>
    %4 = vector.broadcast %3 : vector<1x96xf32> to vector<32x96xf32>
    %5 = arith.addf %2, %4 : vector<32x96xf32>
    %cst_5 = arith.constant 0.000000e+00 : f32
    %6 = vector.broadcast %cst_5 : f32 to vector<32x96xf32>
    %7 = arith.maximumf %5, %6 : vector<32x96xf32>
    %c0_6 = arith.constant 0 : index
    %c0_7 = arith.constant 0 : index
    %8 = vector.load %arg4[%c0_6, %c0_7] : memref<96x48xf32, #tpu.memory_space<vmem>>, vector<96x48xf32>
    %cst_8 = arith.constant dense<0.000000e+00> : vector<32x48xf32>
    %9 = tpu.matmul %7, %8, %cst_8 {dimension_numbers = #tpu.dot_dimension_numbers<[1], [0], [0], [1], [0, 0, 1, 1], [], []>} : vector<32x96xf32>, vector<96x48xf32>, vector<32x48xf32> -> vector<32x48xf32>
    %c0_9 = arith.constant 0 : index
    %c0_10 = arith.constant 0 : index
    %10 = vector.load %arg5[%c0_9, %c0_10] : memref<1x48xf32, #tpu.memory_space<vmem>>, vector<1x48xf32>
    %11 = vector.broadcast %10 : vector<1x48xf32> to vector<32x48xf32>
    %12 = arith.addf %9, %11 : vector<32x48xf32>
    %cst_11 = arith.constant 0.000000e+00 : f32
    %13 = vector.broadcast %cst_11 : f32 to vector<32x48xf32>
    %14 = arith.maximumf %12, %13 : vector<32x48xf32>
    %c0_12 = arith.constant 0 : index
    %c0_13 = arith.constant 0 : index
    %15 = vector.load %arg6[%c0_12, %c0_13] : memref<48x24xf32, #tpu.memory_space<vmem>>, vector<48x24xf32>
    %cst_14 = arith.constant dense<0.000000e+00> : vector<32x24xf32>
    %16 = tpu.matmul %14, %15, %cst_14 {dimension_numbers = #tpu.dot_dimension_numbers<[1], [0], [0], [1], [0, 0, 1, 1], [], []>} : vector<32x48xf32>, vector<48x24xf32>, vector<32x24xf32> -> vector<32x24xf32>
    %c0_15 = arith.constant 0 : index
    %c0_16 = arith.constant 0 : index
    %17 = vector.load %arg7[%c0_15, %c0_16] : memref<1x24xf32, #tpu.memory_space<vmem>>, vector<1x24xf32>
    %18 = vector.broadcast %17 : vector<1x24xf32> to vector<32x24xf32>
    %19 = arith.addf %16, %18 : vector<32x24xf32>
    %cst_17 = arith.constant 0.000000e+00 : f32
    %20 = vector.broadcast %cst_17 : f32 to vector<32x24xf32>
    %21 = arith.maximumf %19, %20 : vector<32x24xf32>
    %c0_18 = arith.constant 0 : index
    %c0_19 = arith.constant 0 : index
    %22 = vector.load %arg8[%c0_18, %c0_19] : memref<24x2xf32, #tpu.memory_space<vmem>>, vector<24x2xf32>
    %cst_20 = arith.constant dense<0.000000e+00> : vector<32x2xf32>
    %23 = tpu.matmul %21, %22, %cst_20 {dimension_numbers = #tpu.dot_dimension_numbers<[1], [0], [0], [1], [0, 0, 1, 1], [], []>} : vector<32x24xf32>, vector<24x2xf32>, vector<32x2xf32> -> vector<32x2xf32>
    %c0_21 = arith.constant 0 : index
    %c0_22 = arith.constant 0 : index
    %24 = vector.load %arg9[%c0_21, %c0_22] : memref<1x2xf32, #tpu.memory_space<vmem>>, vector<1x2xf32>
    %25 = vector.broadcast %24 : vector<1x2xf32> to vector<32x2xf32>
    %26 = arith.addf %23, %25 : vector<32x2xf32>
    %cst_23 = arith.constant 0.000000e+00 : f32
    %27 = vector.broadcast %cst_23 : f32 to vector<32x2xf32>
    %28 = arith.maximumf %26, %27 : vector<32x2xf32>
    %29 = vector.extract_strided_slice %28 {offsets = [0, 0], sizes = [32, 1], strides = [1, 1]} : vector<32x2xf32> to vector<32x1xf32>
    %30 = vector.extract_strided_slice %28 {offsets = [0, 1], sizes = [32, 1], strides = [1, 1]} : vector<32x2xf32> to vector<32x1xf32>
    %31 = arith.subf %30, %29 : vector<32x1xf32>
    %32 = math.exp %31 : vector<32x1xf32>
    %cst_24 = arith.constant 1.000000e+00 : f32
    %33 = vector.broadcast %cst_24 : f32 to vector<32x1xf32>
    %34 = arith.addf %33, %32 : vector<32x1xf32>
    %35 = tpu.reciprocal %34 : vector<32x1xf32> -> vector<32x1xf32>
    %cst_25 = arith.constant 1.000000e+00 : f32
    %36 = vector.broadcast %cst_25 : f32 to vector<32x1xf32>
    %37 = arith.subf %36, %35 : vector<32x1xf32>
    %38 = tpu.concatenate %35, %37 in 1 : vector<32x1xf32>, vector<32x1xf32> -> vector<32x2xf32>
    %c0_26 = arith.constant 0 : index
    %c0_27 = arith.constant 0 : index
    %39 = vector.load %arg10[%c0_26, %c0_27] : memref<32x2xf32, #tpu.memory_space<vmem>>, vector<32x2xf32>
    tpu.vector_store %arg10[%c0_26, %c0_27], %38 {strides = array<i32>} : memref<32x2xf32, #tpu.memory_space<vmem>>, vector<32x2xf32>,
    return
  }
  func.func @transform_0(%arg0: i32) -> (i32, i32) {
    %c0_i32 = arith.constant 0 : i32
    %c0_i32_0 = arith.constant 0 : i32
    return %arg0, %c0_i32 : i32, i32
  }
  func.func @transform_1(%arg0: i32) -> (i32, i32) {
    %c0_i32 = arith.constant 0 : i32
    %c0_i32_0 = arith.constant 0 : i32
    %c0_i32_1 = arith.constant 0 : i32
    return %c0_i32, %c0_i32_0 : i32, i32
  }
  func.func @transform_2(%arg0: i32) -> (i32, i32) {
    %c0_i32 = arith.constant 0 : i32
    %c0_i32_0 = arith.constant 0 : i32
    %c0_i32_1 = arith.constant 0 : i32
    return %c0_i32, %c0_i32_0 : i32, i32
  }
  func.func @transform_3(%arg0: i32) -> (i32, i32) {
    %c0_i32 = arith.constant 0 : i32
    %c0_i32_0 = arith.constant 0 : i32
    %c0_i32_1 = arith.constant 0 : i32
    return %c0_i32, %c0_i32_0 : i32, i32
  }
  func.func @transform_4(%arg0: i32) -> (i32, i32) {
    %c0_i32 = arith.constant 0 : i32
    %c0_i32_0 = arith.constant 0 : i32
    %c0_i32_1 = arith.constant 0 : i32
    return %c0_i32, %c0_i32_0 : i32, i32
  }
  func.func @transform_5(%arg0: i32) -> (i32, i32) {
    %c0_i32 = arith.constant 0 : i32
    %c0_i32_0 = arith.constant 0 : i32
    %c0_i32_1 = arith.constant 0 : i32
    return %c0_i32, %c0_i32_0 : i32, i32
  }
  func.func @transform_6(%arg0: i32) -> (i32, i32) {
    %c0_i32 = arith.constant 0 : i32
    %c0_i32_0 = arith.constant 0 : i32
    %c0_i32_1 = arith.constant 0 : i32
    return %c0_i32, %c0_i32_0 : i32, i32
  }
  func.func @transform_7(%arg0: i32) -> (i32, i32) {
    %c0_i32 = arith.constant 0 : i32
    %c0_i32_0 = arith.constant 0 : i32
    %c0_i32_1 = arith.constant 0 : i32
    return %c0_i32, %c0_i32_0 : i32, i32
  }
  func.func @transform_8(%arg0: i32) -> (i32, i32) {
    %c0_i32 = arith.constant 0 : i32
    %c0_i32_0 = arith.constant 0 : i32
    %c0_i32_1 = arith.constant 0 : i32
    return %c0_i32, %c0_i32_0 : i32, i32
  }
  func.func @transform_9(%arg0: i32) -> (i32, i32) {
    %c0_i32 = arith.constant 0 : i32
    %c0_i32_0 = arith.constant 0 : i32
    return %arg0, %c0_i32 : i32, i32
  }
}

</mosaic_0001>

<llo_original>
// kernel: tpu_custom_call.1
$region0: #{tpu_custom_call.1}
  #allocation0 [shape = 'u32[]', space=smem, size = 0x4, offset = 0x4, fixed_abs, tag = 'smem constant byte address 0x4 - core index']
  #allocation1 [shape = 'u32[144,128]{1,0:T(1,128)}', space=vmem, size = 0x12000, scoped, tag = 'internal scratch']
  %s0 = inlined_call_operand.hbm [shape: f32[32,192], index: 0, kind: input, shape index: {}]
  %s1 = inlined_call_operand.vmem [shape: f32[192,96], index: 1, kind: input, shape index: {}]
  %s2 = inlined_call_operand.vmem [shape: f32[1,96], index: 2, kind: input, shape index: {}]
  %s3 = inlined_call_operand.vmem [shape: f32[96,48], index: 3, kind: input, shape index: {}]
  %s4 = inlined_call_operand.vmem [shape: f32[1,48], index: 4, kind: input, shape index: {}]
  %s5 = inlined_call_operand.vmem [shape: f32[48,24], index: 5, kind: input, shape index: {}]
  %s6 = inlined_call_operand.vmem [shape: f32[1,24], index: 6, kind: input, shape index: {}]
  %s7 = inlined_call_operand.vmem [shape: f32[24,2], index: 7, kind: input, shape index: {}]
  %s8 = inlined_call_operand.vmem [shape: f32[1,2], index: 8, kind: input, shape index: {}]
  %s9 = inlined_call_operand.vmem [shape: f32[32,2], index: 9, kind: output, shape index: {}]
  %s10 = sld [smem:[#allocation0]]
  $region50: #{tpu_custom_call.1} parent=0
    _
  %s12 = ssub.s32 1, %s10
  %s13 = scalar_select 0, %s12, %s10
  $region1: #{tpu_custom_call.1} parent=0
    #allocation2 [shape = 'u8[32768]{0}', space=vmem, size = 0x8000, scoped, tag = 'input window, operand 0, single buffered']
    #allocation3 [shape = 's32[1]{0}', space=sflag, size = 0x4, scoped, tag = 'scoped memory for tpu_custom_call.1']
    %14 = vsyncpa [#allocation3], 0
    // Predicated region
    $region2: #{tpu_custom_call.1} parent=1 // pred_check
      _
    $region3: #{tpu_custom_call.1} parent=1 // pred_check_branch
      %16 = sbr.rel (0) target = $region5
    $region4: #{tpu_custom_call.1} parent=1 // pred_region
      %s18 = ssub.s32 1024, 1024
      %19 = vsyncadd [#allocation3], %s18
      %s20 = sshll.u32 [#allocation2], 4
      %s21 = int_to_ptr.vmem [resolvable:$true] %s20
      %26 = dma.hbm_to_vmem [thread:$0]  %s0, 1024, %s21, [#allocation3], 256, 256, 16
    $region5: #{tpu_custom_call.1} parent=1 // pred_fallthru
      _
    // Predicated region
    $region6: #{tpu_custom_call.1} parent=1 // pred_check
      _
    $region7: #{tpu_custom_call.1} parent=1 // pred_check_branch
      %28 = sbr.rel (0) target = $region9
    $region8: #{tpu_custom_call.1} parent=1 // pred_region
      _
    $region9: #{tpu_custom_call.1} parent=1 // pred_fallthru
      _
    // Predicated region
    $region10: #{tpu_custom_call.1} parent=1 // pred_check
      _
    $region11: #{tpu_custom_call.1} parent=1 // pred_check_branch
      %30 = sbr.rel (0) target = $region13
    $region12: #{tpu_custom_call.1} parent=1 // pred_region
      _
    $region13: #{tpu_custom_call.1} parent=1 // pred_fallthru
      _
    // Predicated region
    $region14: #{tpu_custom_call.1} parent=1 // pred_check
      _
    $region15: #{tpu_custom_call.1} parent=1 // pred_check_branch
      %32 = sbr.rel (0) target = $region17
    $region16: #{tpu_custom_call.1} parent=1 // pred_region
      _
    $region17: #{tpu_custom_call.1} parent=1 // pred_fallthru
      _
    // Predicated region
    $region18: #{tpu_custom_call.1} parent=1 // pred_check
      _
    $region19: #{tpu_custom_call.1} parent=1 // pred_check_branch
      %34 = sbr.rel (0) target = $region21
    $region20: #{tpu_custom_call.1} parent=1 // pred_region
      _
    $region21: #{tpu_custom_call.1} parent=1 // pred_fallthru
      _
    // Predicated region
    $region22: #{tpu_custom_call.1} parent=1 // pred_check
      _
    $region23: #{tpu_custom_call.1} parent=1 // pred_check_branch
      %36 = sbr.rel (0) target = $region25
    $region24: #{tpu_custom_call.1} parent=1 // pred_region
      _
    $region25: #{tpu_custom_call.1} parent=1 // pred_fallthru
      _
    // Predicated region
    $region26: #{tpu_custom_call.1} parent=1 // pred_check
      _
    $region27: #{tpu_custom_call.1} parent=1 // pred_check_branch
      %38 = sbr.rel (0) target = $region29
    $region28: #{tpu_custom_call.1} parent=1 // pred_region
      _
    $region29: #{tpu_custom_call.1} parent=1 // pred_fallthru
      _
    // Predicated region
    $region30: #{tpu_custom_call.1} parent=1 // pred_check
      _
    $region31: #{tpu_custom_call.1} parent=1 // pred_check_branch
      %40 = sbr.rel (0) target = $region33
    $region32: #{tpu_custom_call.1} parent=1 // pred_region
      _
    $region33: #{tpu_custom_call.1} parent=1 // pred_fallthru
      _
    // Predicated region
    $region34: #{tpu_custom_call.1} parent=1 // pred_check
      _
    $region35: #{tpu_custom_call.1} parent=1 // pred_check_branch
      %42 = sbr.rel (0) target = $region37
    $region36: #{tpu_custom_call.1} parent=1 // pred_region
      _
    $region37: #{tpu_custom_call.1} parent=1 // pred_fallthru
      _
    // Predicated region
    $region38: #{tpu_custom_call.1} parent=1 // pred_check
      _
    $region39: #{tpu_custom_call.1} parent=1 // pred_check_branch
      %44 = sbr.rel (0) target = $region41
    $region40: #{tpu_custom_call.1} parent=1 // pred_region
      %45 = dma.done [#allocation3], 1024
    $region41: #{tpu_custom_call.1} parent=1 // pred_fallthru
      _
    %v46 = vld [vmem:[#allocation2] sm:$0xff]
    %v47 = vld [vmem:[#allocation2 + $0x8] sm:$0xff]
    %v48 = vld [vmem:[#allocation2 + $0x10] sm:$0xff]
    %v49 = vld [vmem:[#allocation2 + $0x18] sm:$0xff]
    %v50 = vld [vmem:[#allocation2 + $0x20] sm:$0xff]
    %v51 = vld [vmem:[#allocation2 + $0x28] sm:$0xff]
    %v52 = vld [vmem:[#allocation2 + $0x30] sm:$0xff]
    %v53 = vld [vmem:[#allocation2 + $0x38] sm:$0xff]
    %v54 = vld [vmem:[%s1] sm:$0xff]
    %v55 = vld [vmem:[%s1 + $0x8] sm:$0xff]
    %v56 = vld [vmem:[%s1 + $0x10] sm:$0xff]
    %v57 = vld [vmem:[%s1 + $0x18] sm:$0xff]
    %v58 = vld [vmem:[%s1 + $0x20] sm:$0xff]
    %v59 = vld [vmem:[%s1 + $0x28] sm:$0xff]
    %v60 = vld [vmem:[%s1 + $0x30] sm:$0xff]
    %v61 = vld [vmem:[%s1 + $0x38] sm:$0xff]
    %v62 = vld [vmem:[%s1 + $0x40] sm:$0xff]
    %v63 = vld [vmem:[%s1 + $0x48] sm:$0xff]
    %v64 = vld [vmem:[%s1 + $0x50] sm:$0xff]
    %v65 = vld [vmem:[%s1 + $0x58] sm:$0xff]
    %v66 = vld [vmem:[%s1 + $0x60] sm:$0xff]
    %v67 = vld [vmem:[%s1 + $0x68] sm:$0xff]
    %v68 = vld [vmem:[%s1 + $0x70] sm:$0xff]
    %v69 = vld [vmem:[%s1 + $0x78] sm:$0xff]
    %v70 = vld [vmem:[%s1 + $0x80] sm:$0xff]
    %v71 = vld [vmem:[%s1 + $0x88] sm:$0xff]
    %v72 = vld [vmem:[%s1 + $0x90] sm:$0xff]
    %v73 = vld [vmem:[%s1 + $0x98] sm:$0xff]
    %v74 = vld [vmem:[%s1 + $0xa0] sm:$0xff]
    %v75 = vld [vmem:[%s1 + $0xa8] sm:$0xff]
    %v76 = vld [vmem:[%s1 + $0xb0] sm:$0xff]
    %v77 = vld [vmem:[%s1 + $0xb8] sm:$0xff]
    %v78 = vld [vmem:[%s2] sm:$0x1]
    %v80 = vlaneseq
    %v81 = vshrl.u32 %v80, 7
    %v82 = vsub.s32 0, %v81
    %v83 = vrot.slane %v78, %v82
    %vm85 = vcmask 523264
    %v87 = vsel %vm85, %v47, 0
    %v90 = vsel %vm85, %v49, 0
    %v93 = vsel %vm85, %v51, 0
    %v96 = vsel %vm85, %v53, 0
    %98 = vmatprep.subr.mxu0 0.0
    %99 = vmatpush1.msra.mxu0 %v54
    %100 = vmatprep.subr.mxu0 0.0
    %101 = vmatpush1.msra.mxu0 %v55
    %102 = vmatprep.subr.mxu0 0.0
    %103 = vmatpush1.msra.mxu0 %v56
    %104 = vmatprep.subr.mxu0 0.0
    %105 = vmatpush1.msra.mxu0 %v57
    %106 = vmatprep.subr.mxu0 0.0
    %107 = vmatpush1.msra.mxu0 %v58
    %108 = vmatprep.subr.mxu0 0.0
    %109 = vmatpush1.msra.mxu0 %v59
    %110 = vmatprep.subr.mxu0 0.0
    %111 = vmatpush1.msra.mxu0 %v60
    %112 = vmatprep.subr.mxu0 0.0
    %113 = vmatpush1.msra.mxu0 %v61
    %114 = vmatprep.subr.mxu0 0.0
    %115 = vmatpush1.msra.mxu0 %v62
    %116 = vmatprep.subr.mxu0 0.0
    %117 = vmatpush1.msra.mxu0 %v63
    %118 = vmatprep.subr.mxu0 0.0
    %119 = vmatpush1.msra.mxu0 %v64
    %120 = vmatprep.subr.mxu0 0.0
    %121 = vmatpush1.msra.mxu0 %v65
    %122 = vmatprep.subr.mxu0 0.0
    %123 = vmatpush1.msra.mxu0 %v66
    %124 = vmatprep.subr.mxu0 0.0
    %125 = vmatpush1.msra.mxu0 %v67
    %126 = vmatprep.subr.mxu0 0.0
    %127 = vmatpush1.msra.mxu0 %v68
    %128 = vmatprep.subr.mxu0 0.0
    %129 = vmatpush1.msra.mxu0 %v69
    %130 = vmatprep.subr.mxu0 0.0
    %131 = vmatpush1.msra.mxu0 %v70
    %132 = vmatprep.subr.mxu0 0.0
    %133 = vmatpush1.msra.mxu0 %v71
    %134 = vmatprep.subr.mxu0 0.0
    %135 = vmatpush1.msra.mxu0 %v72
    %136 = vmatprep.subr.mxu0 0.0
    %137 = vmatpush1.msra.mxu0 %v73
    %138 = vmatprep.subr.mxu0 0.0
    %139 = vmatpush1.msra.mxu0 %v74
    %140 = vmatprep.subr.mxu0 0.0
    %141 = vmatpush1.msra.mxu0 %v75
    %142 = vmatprep.subr.mxu0 0.0
    %143 = vmatpush1.msra.mxu0 %v76
    %144 = vmatprep.subr.mxu0 0.0
    %145 = vmatpush1.msra.mxu0 %v77
    %146 = vmatprep.subr.mxu0 0.0
    %147 = vmatpush1.msra.mxu0 0.0
    %148 = vmatprep.subr.mxu0 0.0
    %149 = vmatpush1.msra.mxu0 0.0
    %150 = vmatprep.subr.mxu0 0.0
    %151 = vmatpush1.msra.mxu0 0.0
    %152 = vmatprep.subr.mxu0 0.0
    %153 = vmatpush1.msra.mxu0 0.0
    %154 = vmatprep.subr.mxu0 0.0
    %155 = vmatpush1.msra.mxu0 0.0
    %156 = vmatprep.subr.mxu0 0.0
    %157 = vmatpush1.msra.mxu0 0.0
    %158 = vmatprep.subr.mxu0 0.0
    %159 = vmatpush1.msra.mxu0 0.0
    %160 = vmatprep.subr.mxu0 0.0
    %161 = vmatpush1.msra.mxu0 0.0
    %162 = vmatprep.mubr.f32.mxu0 %v87
    %163 = vmatmul.mubr.f32.gmra.mrb[0].mxu0 %v46
    %v164 = vpop.f32.mrb[0].mxu0
    %v165 = vadd.f32 %v83, %v164
    %v166 = vpop.f32.mrb[0].mxu0
    %167 = vmatprep.mubr.f32.mxu0 %v90
    %168 = vmatmul.mubr.f32.gmra.mrb[0].mxu0 %v48
    %v169 = vpop.f32.mrb[0].mxu0
    %v170 = vadd.f32 %v83, %v169
    %v171 = vpop.f32.mrb[0].mxu0
    %172 = vmatprep.mubr.f32.mxu0 %v93
    %173 = vmatmul.mubr.f32.gmra.mrb[0].mxu0 %v50
    %v174 = vpop.f32.mrb[0].mxu0
    %v175 = vadd.f32 %v83, %v174
    %v176 = vpop.f32.mrb[0].mxu0
    %177 = vmatprep.mubr.f32.mxu0 %v96
    %178 = vmatmul.mubr.f32.gmra.mrb[0].mxu0 %v52
    %v179 = vpop.f32.mrb[0].mxu0
    %v180 = vadd.f32 %v83, %v179
    %v181 = vpop.f32.mrb[0].mxu0
    %182 = vdwg.mxu0
    %v183 = vmax.f32 %v165, 0.0
    %v184 = vmax.f32 %v170, 0.0
    %v185 = vmax.f32 %v175, 0.0
    %v186 = vmax.f32 %v180, 0.0
    %v187 = vld [vmem:[%s3] sm:$0xff]
    %v188 = vld [vmem:[%s3 + $0x8] sm:$0xff]
    %v189 = vld [vmem:[%s3 + $0x10] sm:$0xff]
    %v190 = vld [vmem:[%s3 + $0x18] sm:$0xff]
    %v191 = vld [vmem:[%s3 + $0x20] sm:$0xff]
    %v192 = vld [vmem:[%s3 + $0x28] sm:$0xff]
    %v193 = vld [vmem:[%s3 + $0x30] sm:$0xff]
    %v194 = vld [vmem:[%s3 + $0x38] sm:$0xff]
    %v195 = vld [vmem:[%s3 + $0x40] sm:$0xff]
    %v196 = vld [vmem:[%s3 + $0x48] sm:$0xff]
    %v197 = vld [vmem:[%s3 + $0x50] sm:$0xff]
    %v198 = vld [vmem:[%s3 + $0x58] sm:$0xff]
    %v199 = vld [vmem:[%s4] sm:$0x1]
    %v201 = vlaneseq
    %v202 = vshrl.u32 %v201, 7
    %v203 = vsub.s32 0, %v202
    %v204 = vrot.slane %v199, %v203
    %vm206 = vcmask 785408
    %v208 = vsel %vm206, %v183, 0
    %v211 = vsel %vm206, %v184, 0
    %v214 = vsel %vm206, %v185, 0
    %v217 = vsel %vm206, %v186, 0
    %219 = vmatprep.subr.mxu0 0.0
    %220 = vmatpush1.msra.mxu0 %v187
    %221 = vmatprep.subr.mxu0 0.0
    %222 = vmatpush1.msra.mxu0 %v188
    %223 = vmatprep.subr.mxu0 0.0
    %224 = vmatpush1.msra.mxu0 %v189
    %225 = vmatprep.subr.mxu0 0.0
    %226 = vmatpush1.msra.mxu0 %v190
    %227 = vmatprep.subr.mxu0 0.0
    %228 = vmatpush1.msra.mxu0 %v191
    %229 = vmatprep.subr.mxu0 0.0
    %230 = vmatpush1.msra.mxu0 %v192
    %231 = vmatprep.subr.mxu0 0.0
    %232 = vmatpush1.msra.mxu0 %v193
    %233 = vmatprep.subr.mxu0 0.0
    %234 = vmatpush1.msra.mxu0 %v194
    %235 = vmatprep.subr.mxu0 0.0
    %236 = vmatpush1.msra.mxu0 %v195
    %237 = vmatprep.subr.mxu0 0.0
    %238 = vmatpush1.msra.mxu0 %v196
    %239 = vmatprep.subr.mxu0 0.0
    %240 = vmatpush1.msra.mxu0 %v197
    %241 = vmatprep.subr.mxu0 0.0
    %242 = vmatpush1.msra.mxu0 %v198
    %243 = vmatprep.subr.mxu0 0.0
    %244 = vmatpush1.msra.mxu0 0.0
    %245 = vmatprep.subr.mxu0 0.0
    %246 = vmatpush1.msra.mxu0 0.0
    %247 = vmatprep.subr.mxu0 0.0
    %248 = vmatpush1.msra.mxu0 0.0
    %249 = vmatprep.subr.mxu0 0.0
    %250 = vmatpush1.msra.mxu0 0.0
    %251 = vmatprep.subr.mxu0 0.0
    %252 = vmatpush1.msra.mxu0 0.0
    %253 = vmatprep.subr.mxu0 0.0
    %254 = vmatpush1.msra.mxu0 0.0
    %255 = vmatprep.subr.mxu0 0.0
    %256 = vmatpush1.msra.mxu0 0.0
    %257 = vmatprep.subr.mxu0 0.0
    %258 = vmatpush1.msra.mxu0 0.0
    %259 = vmatprep.subr.mxu0 0.0
    %260 = vmatpush1.msra.mxu0 0.0
    %261 = vmatprep.subr.mxu0 0.0
    %262 = vmatpush1.msra.mxu0 0.0
    %263 = vmatprep.subr.mxu0 0.0
    %264 = vmatpush1.msra.mxu0 0.0
    %265 = vmatprep.subr.mxu0 0.0
    %266 = vmatpush1.msra.mxu0 0.0
    %267 = vmatprep.subr.mxu0 0.0
    %268 = vmatpush1.msra.mxu0 0.0
    %269 = vmatprep.subr.mxu0 0.0
    %270 = vmatpush1.msra.mxu0 0.0
    %271 = vmatprep.subr.mxu0 0.0
    %272 = vmatpush1.msra.mxu0 0.0
    %273 = vmatprep.subr.mxu0 0.0
    %274 = vmatpush1.msra.mxu0 0.0
    %275 = vmatprep.subr.mxu0 0.0
    %276 = vmatpush1.msra.mxu0 0.0
    %277 = vmatprep.subr.mxu0 0.0
    %278 = vmatpush1.msra.mxu0 0.0
    %279 = vmatprep.subr.mxu0 0.0
    %280 = vmatpush1.msra.mxu0 0.0
    %281 = vmatprep.subr.mxu0 0.0
    %282 = vmatpush1.msra.mxu0 0.0
    %283 = vmatprep.mubr.f32.mxu0 0.0
    %284 = vmatmul.mubr.f32.gmra.mrb[0].mxu0 %v208
    %v285 = vpop.f32.mrb[0].mxu0
    %v286 = vadd.f32 %v204, %v285
    %v287 = vpop.f32.mrb[0].mxu0
    %288 = vmatprep.mubr.f32.mxu0 0.0
    %289 = vmatmul.mubr.f32.gmra.mrb[0].mxu0 %v211
    %v290 = vpop.f32.mrb[0].mxu0
    %v291 = vadd.f32 %v204, %v290
    %v292 = vpop.f32.mrb[0].mxu0
    %293 = vmatprep.mubr.f32.mxu0 0.0
    %294 = vmatmul.mubr.f32.gmra.mrb[0].mxu0 %v214
    %v295 = vpop.f32.mrb[0].mxu0
    %v296 = vadd.f32 %v204, %v295
    %v297 = vpop.f32.mrb[0].mxu0
    %298 = vmatprep.mubr.f32.mxu0 0.0
    %299 = vmatmul.mubr.f32.gmra.mrb[0].mxu0 %v217
    %v300 = vpop.f32.mrb[0].mxu0
    %v301 = vadd.f32 %v204, %v300
    %v302 = vpop.f32.mrb[0].mxu0
    %303 = vdwg.mxu0
    %v304 = vmax.f32 %v286, 0.0
    %v305 = vmax.f32 %v291, 0.0
    %v306 = vmax.f32 %v296, 0.0
    %v307 = vmax.f32 %v301, 0.0
    %v308 = vld [vmem:[%s5] sm:$0xff]
    %v309 = vld [vmem:[%s5 + $0x8] sm:$0xff]
    %v310 = vld [vmem:[%s5 + $0x10] sm:$0xff]
    %v311 = vld [vmem:[%s5 + $0x18] sm:$0xff]
    %v312 = vld [vmem:[%s5 + $0x20] sm:$0xff]
    %v313 = vld [vmem:[%s5 + $0x28] sm:$0xff]
    %v314 = vld [vmem:[%s6] sm:$0x1]
    %v316 = vlaneseq
    %v317 = vshrl.u32 %v316, 7
    %v318 = vsub.s32 0, %v317
    %v319 = vrot.slane %v314, %v318
    %vm321 = vcmask 392192
    %v323 = vsel %vm321, %v304, 0
    %v326 = vsel %vm321, %v305, 0
    %v329 = vsel %vm321, %v306, 0
    %v332 = vsel %vm321, %v307, 0
    %334 = vmatprep.subr.mxu0 0.0
    %335 = vmatpush1.msra.mxu0 %v308
    %336 = vmatprep.subr.mxu0 0.0
    %337 = vmatpush1.msra.mxu0 %v309
    %338 = vmatprep.subr.mxu0 0.0
    %339 = vmatpush1.msra.mxu0 %v310
    %340 = vmatprep.subr.mxu0 0.0
    %341 = vmatpush1.msra.mxu0 %v311
    %342 = vmatprep.subr.mxu0 0.0
    %343 = vmatpush1.msra.mxu0 %v312
    %344 = vmatprep.subr.mxu0 0.0
    %345 = vmatpush1.msra.mxu0 %v313
    %346 = vmatprep.subr.mxu0 0.0
    %347 = vmatpush1.msra.mxu0 0.0
    %348 = vmatprep.subr.mxu0 0.0
    %349 = vmatpush1.msra.mxu0 0.0
    %350 = vmatprep.subr.mxu0 0.0
    %351 = vmatpush1.msra.mxu0 0.0
    %352 = vmatprep.subr.mxu0 0.0
    %353 = vmatpush1.msra.mxu0 0.0
    %354 = vmatprep.subr.mxu0 0.0
    %355 = vmatpush1.msra.mxu0 0.0
    %356 = vmatprep.subr.mxu0 0.0
    %357 = vmatpush1.msra.mxu0 0.0
    %358 = vmatprep.subr.mxu0 0.0
    %359 = vmatpush1.msra.mxu0 0.0
    %360 = vmatprep.subr.mxu0 0.0
    %361 = vmatpush1.msra.mxu0 0.0
    %362 = vmatprep.subr.mxu0 0.0
    %363 = vmatpush1.msra.mxu0 0.0
    %364 = vmatprep.subr.mxu0 0.0
    %365 = vmatpush1.msra.mxu0 0.0
    %366 = vmatprep.subr.mxu0 0.0
    %367 = vmatpush1.msra.mxu0 0.0
    %368 = vmatprep.subr.mxu0 0.0
    %369 = vmatpush1.msra.mxu0 0.0
    %370 = vmatprep.subr.mxu0 0.0
    %371 = vmatpush1.msra.mxu0 0.0
    %372 = vmatprep.subr.mxu0 0.0
    %373 = vmatpush1.msra.mxu0 0.0
    %374 = vmatprep.subr.mxu0 0.0
    %375 = vmatpush1.msra.mxu0 0.0
    %376 = vmatprep.subr.mxu0 0.0
    %377 = vmatpush1.msra.mxu0 0.0
    %378 = vmatprep.subr.mxu0 0.0
    %379 = vmatpush1.msra.mxu0 0.0
    %380 = vmatprep.subr.mxu0 0.0
    %381 = vmatpush1.msra.mxu0 0.0
    %382 = vmatprep.subr.mxu0 0.0
    %383 = vmatpush1.msra.mxu0 0.0
    %384 = vmatprep.subr.mxu0 0.0
    %385 = vmatpush1.msra.mxu0 0.0
    %386 = vmatprep.subr.mxu0 0.0
    %387 = vmatpush1.msra.mxu0 0.0
    %388 = vmatprep.subr.mxu0 0.0
    %389 = vmatpush1.msra.mxu0 0.0
    %390 = vmatprep.subr.mxu0 0.0
    %391 = vmatpush1.msra.mxu0 0.0
    %392 = vmatprep.subr.mxu0 0.0
    %393 = vmatpush1.msra.mxu0 0.0
    %394 = vmatprep.subr.mxu0 0.0
    %395 = vmatpush1.msra.mxu0 0.0
    %396 = vmatprep.subr.mxu0 0.0
    %397 = vmatpush1.msra.mxu0 0.0
    %398 = vmatprep.mubr.f32.mxu0 0.0
    %399 = vmatmul.mubr.f32.gmra.mrb[0].mxu0 %v323
    %v400 = vpop.f32.mrb[0].mxu0
    %v401 = vadd.f32 %v319, %v400
    %v402 = vpop.f32.mrb[0].mxu0
    %403 = vmatprep.mubr.f32.mxu0 0.0
    %404 = vmatmul.mubr.f32.gmra.mrb[0].mxu0 %v326
    %v405 = vpop.f32.mrb[0].mxu0
    %v406 = vadd.f32 %v319, %v405
    %v407 = vpop.f32.mrb[0].mxu0
    %408 = vmatprep.mubr.f32.mxu0 0.0
    %409 = vmatmul.mubr.f32.gmra.mrb[0].mxu0 %v329
    %v410 = vpop.f32.mrb[0].mxu0
    %v411 = vadd.f32 %v319, %v410
    %v412 = vpop.f32.mrb[0].mxu0
    %413 = vmatprep.mubr.f32.mxu0 0.0
    %414 = vmatmul.mubr.f32.gmra.mrb[0].mxu0 %v332
    %v415 = vpop.f32.mrb[0].mxu0
    %v416 = vadd.f32 %v319, %v415
    %v417 = vpop.f32.mrb[0].mxu0
    %418 = vdwg.mxu0
    %v419 = vmax.f32 %v401, 0.0
    %v420 = vmax.f32 %v406, 0.0
    %v421 = vmax.f32 %v411, 0.0
    %v422 = vmax.f32 %v416, 0.0
    %v423 = vld [vmem:[%s7] sm:$0xff]
    %v424 = vld [vmem:[%s7 + $0x8] sm:$0xff]
    %v425 = vld [vmem:[%s7 + $0x10] sm:$0xff]
    %v426 = vld [vmem:[%s8] sm:$0x1]
    %v428 = vlaneseq
    %v429 = vshrl.u32 %v428, 7
    %v430 = vsub.s32 0, %v429
    %v431 = vrot.slane %v426, %v430
    %vm433 = vcmask 195584
    %v435 = vsel %vm433, %v419, 0
    %v438 = vsel %vm433, %v420, 0
    %v441 = vsel %vm433, %v421, 0
    %v444 = vsel %vm433, %v422, 0
    %446 = vmatprep.subr.mxu0 0.0
    %447 = vmatpush1.msra.mxu0 %v423
    %448 = vmatprep.subr.mxu0 0.0
    %449 = vmatpush1.msra.mxu0 %v424
    %450 = vmatprep.subr.mxu0 0.0
    %451 = vmatpush1.msra.mxu0 %v425
    %452 = vmatprep.subr.mxu0 0.0
    %453 = vmatpush1.msra.mxu0 0.0
    %454 = vmatprep.subr.mxu0 0.0
    %455 = vmatpush1.msra.mxu0 0.0
    %456 = vmatprep.subr.mxu0 0.0
    %457 = vmatpush1.msra.mxu0 0.0
    %458 = vmatprep.subr.mxu0 0.0
    %459 = vmatpush1.msra.mxu0 0.0
    %460 = vmatprep.subr.mxu0 0.0
    %461 = vmatpush1.msra.mxu0 0.0
    %462 = vmatprep.subr.mxu0 0.0
    %463 = vmatpush1.msra.mxu0 0.0
    %464 = vmatprep.subr.mxu0 0.0
    %465 = vmatpush1.msra.mxu0 0.0
    %466 = vmatprep.subr.mxu0 0.0
    %467 = vmatpush1.msra.mxu0 0.0
    %468 = vmatprep.subr.mxu0 0.0
    %469 = vmatpush1.msra.mxu0 0.0
    %470 = vmatprep.subr.mxu0 0.0
    %471 = vmatpush1.msra.mxu0 0.0
    %472 = vmatprep.subr.mxu0 0.0
    %473 = vmatpush1.msra.mxu0 0.0
    %474 = vmatprep.subr.mxu0 0.0
    %475 = vmatpush1.msra.mxu0 0.0
    %476 = vmatprep.subr.mxu0 0.0
    %477 = vmatpush1.msra.mxu0 0.0
    %478 = vmatprep.subr.mxu0 0.0
    %479 = vmatpush1.msra.mxu0 0.0
    %480 = vmatprep.subr.mxu0 0.0
    %481 = vmatpush1.msra.mxu0 0.0
    %482 = vmatprep.subr.mxu0 0.0
    %483 = vmatpush1.msra.mxu0 0.0
    %484 = vmatprep.subr.mxu0 0.0
    %485 = vmatpush1.msra.mxu0 0.0
    %486 = vmatprep.subr.mxu0 0.0
    %487 = vmatpush1.msra.mxu0 0.0
    %488 = vmatprep.subr.mxu0 0.0
    %489 = vmatpush1.msra.mxu0 0.0
    %490 = vmatprep.subr.mxu0 0.0
    %491 = vmatpush1.msra.mxu0 0.0
    %492 = vmatprep.subr.mxu0 0.0
    %493 = vmatpush1.msra.mxu0 0.0
    %494 = vmatprep.subr.mxu0 0.0
    %495 = vmatpush1.msra.mxu0 0.0
    %496 = vmatprep.subr.mxu0 0.0
    %497 = vmatpush1.msra.mxu0 0.0
    %498 = vmatprep.subr.mxu0 0.0
    %499 = vmatpush1.msra.mxu0 0.0
    %500 = vmatprep.subr.mxu0 0.0
    %501 = vmatpush1.msra.mxu0 0.0
    %502 = vmatprep.subr.mxu0 0.0
    %503 = vmatpush1.msra.mxu0 0.0
    %504 = vmatprep.subr.mxu0 0.0
    %505 = vmatpush1.msra.mxu0 0.0
    %506 = vmatprep.subr.mxu0 0.0
    %507 = vmatpush1.msra.mxu0 0.0
    %508 = vmatprep.subr.mxu0 0.0
    %509 = vmatpush1.msra.mxu0 0.0
    %510 = vmatprep.mubr.f32.mxu0 0.0
    %511 = vmatmul.mubr.f32.gmra.mrb[0].mxu0 %v435
    %v512 = vpop.f32.mrb[0].mxu0
    %v513 = vadd.f32 %v431, %v512
    %v514 = vpop.f32.mrb[0].mxu0
    %515 = vmatprep.mubr.f32.mxu0 0.0
    %516 = vmatmul.mubr.f32.gmra.mrb[0].mxu0 %v438
    %v517 = vpop.f32.mrb[0].mxu0
    %v518 = vadd.f32 %v431, %v517
    %v519 = vpop.f32.mrb[0].mxu0
    %520 = vmatprep.mubr.f32.mxu0 0.0
    %521 = vmatmul.mubr.f32.gmra.mrb[0].mxu0 %v441
    %v522 = vpop.f32.mrb[0].mxu0
    %v523 = vadd.f32 %v431, %v522
    %v524 = vpop.f32.mrb[0].mxu0
    %525 = vmatprep.mubr.f32.mxu0 0.0
    %526 = vmatmul.mubr.f32.gmra.mrb[0].mxu0 %v444
    %v527 = vpop.f32.mrb[0].mxu0
    %v528 = vadd.f32 %v431, %v527
    %v529 = vpop.f32.mrb[0].mxu0
    %530 = vdwg.mxu0
    %v531 = vmax.f32 %v513, 0.0
    %v532 = vmax.f32 %v518, 0.0
    %v533 = vmax.f32 %v523, 0.0
    %v534 = vmax.f32 %v528, 0.0
    %539 = vrot.lane.b32.xlu0 %v531, 1
    %v540 = vpop.permute.xlu0 %539
    %541 = vrot.lane.b32.xlu0 %v532, 1
    %v542 = vpop.permute.xlu0 %541
    %543 = vrot.lane.b32.xlu0 %v533, 1
    %v544 = vpop.permute.xlu0 %543
    %545 = vrot.lane.b32.xlu0 %v534, 1
    %v546 = vpop.permute.xlu0 %545
    %v551 = vsub.f32 %v531, %v540
    %v552 = vsub.f32 %v532, %v542
    %v553 = vsub.f32 %v533, %v544
    %v554 = vsub.f32 %v534, %v546
    %v555 = vmul.f32 %v551, 1.442695
    %v556 = vpow.pop %v555
    %v557 = vmul.f32 %v552, 1.442695
    %v558 = vpow.pop %v557
    %v559 = vmul.f32 %v553, 1.442695
    %v560 = vpow.pop %v559
    %v561 = vmul.f32 %v554, 1.442695
    %v562 = vpow.pop %v561
    %v563 = vadd.f32 %v556, 1.0
    %v564 = vadd.f32 %v558, 1.0
    %v565 = vadd.f32 %v560, 1.0
    %v566 = vadd.f32 %v562, 1.0
    %v567 = vrcp.pop %v563
    %v568 = vrcp.pop %v564
    %v569 = vrcp.pop %v565
    %v570 = vrcp.pop %v566
    %v571 = vsub.f32 1.0, %v567
    %v572 = vsub.f32 1.0, %v568
    %v573 = vsub.f32 1.0, %v569
    %v574 = vsub.f32 1.0, %v570
    %579 = vrot.lane.b32.xlu0 %v567, 127
    %v580 = vpop.permute.xlu0 %579
    %581 = vrot.lane.b32.xlu0 %v568, 127
    %v582 = vpop.permute.xlu0 %581
    %583 = vrot.lane.b32.xlu0 %v569, 127
    %v584 = vpop.permute.xlu0 %583
    %585 = vrot.lane.b32.xlu0 %v570, 127
    %v586 = vpop.permute.xlu0 %585
    %vm591 = vcmask 7168
    %v592 = vsel %vm591, %v580, %v571
    %v593 = vsel %vm591, %v582, %v572
    %v594 = vsel %vm591, %v584, %v573
    %v595 = vsel %vm591, %v586, %v574
    %vm596 = vcmask 15360
    %597 = vst.msk [vmem:[%s9] sm:$0xff] %vm596, %v592
    %598 = vst.msk [vmem:[%s9 + $0x8] sm:$0xff] %vm596, %v593
    %599 = vst.msk [vmem:[%s9 + $0x10] sm:$0xff] %vm596, %v594
    %600 = vst.msk [vmem:[%s9 + $0x18] sm:$0xff] %vm596, %v595
    // Predicated region
    $region42: #{tpu_custom_call.1} parent=1 // pred_check
      _
    $region43: #{tpu_custom_call.1} parent=1 // pred_check_branch
      %602 = sbr.rel (0) target = $region45
    $region44: #{tpu_custom_call.1} parent=1 // pred_region
      _
    $region45: #{tpu_custom_call.1} parent=1 // pred_fallthru
      _
    // Predicated region
    $region46: #{tpu_custom_call.1} parent=1 // pred_check
      _
    $region47: #{tpu_custom_call.1} parent=1 // pred_check_branch
      %604 = sbr.rel (0) target = $region49
    $region48: #{tpu_custom_call.1} parent=1 // pred_region
      _
    $region49: #{tpu_custom_call.1} parent=1 // pred_fallthru
      _
    %605 = vsyncpa [#allocation3], 1

</llo_original>
